<compile_context>
chip_gen: v7x
topology: tpu7x:2x2x1
jax: 0.10.0
libtpu: 0.0.40
codegen_flags: <defaults>
</compile_context>

<pallas_src>
import functools

import jax
import jax.numpy as jnp
from jax.experimental import pallas as pl
from jax.experimental.pallas import tpu as pltpu

_LANES = 128
_SUBLANES = 8


def _bce_partial_kernel(recon_ref, target_ref, out_ref, *, tile_m):
    """Accumulate per-lane-slot BCE partial sums into a core-resident (8,128) f32 block.

    tile_m always divides the row extent exactly (enforced by the wrapper), so there is
    no per-element masking, no phantom iteration and no clamped index_map: every load is
    a full unmasked (tile_m, 128) tile and every VPU/EUP op is real work.
    """
    j = pl.program_id(1)  # reduction axis ("arbitrary"); output block resident across it

    @pl.when(j == 0)
    def _init():
        out_ref[...] = jnp.zeros_like(out_ref)

    # Upcast in-kernel: HBM traffic stays in the input's native dtype.
    x = recon_ref[...].astype(jnp.float32)
    y = target_ref[...].astype(jnp.float32)

    # nn.BCELoss clamps log at -100 (handles x == 0 / x == 1 exactly like PyTorch).
    log_x = jnp.maximum(jnp.log(x), -100.0)
    log_1mx = jnp.maximum(jnp.log(1.0 - x), -100.0)
    bce = -(y * log_x + (1.0 - y) * log_1mx)

    # Fold (tile_m, 128) -> (8, 128) with pure vreg adds. The reshape preserves the
    # (8,128) minor tiles, so it lowers with no VMEM relayout copy; the final cross-lane
    # reduce of the (8,128) partials happens once, in XLA, after the kernel.
    out_ref[...] += bce.reshape(tile_m // _SUBLANES, _SUBLANES, _LANES).sum(axis=0)


def _pick_tiling(m_rows, target_tile_m):
    """Largest tile_m (multiple of 8, <= target) that divides m_rows exactly, plus a
    2-way core split iff it is free (even tile count -> no phantom iterations)."""
    target = min(target_tile_m, m_rows)
    target -= target % _SUBLANES
    tile_m = _SUBLANES  # always divides (m_rows is a multiple of 8)
    for d in range(target, _SUBLANES - 1, -_SUBLANES):
        if m_rows % d == 0:
            tile_m = d
            break
    n_tiles = m_rows // tile_m
    num_splits = 2 if (n_tiles % 2 == 0 and n_tiles >= 2) else 1
    return tile_m, n_tiles, num_splits


def vae_loss(recon, target, mu, logvar, *, tile_m=4096):
    """recon/target: image tensors of identical shape, recon in (0,1); mu/logvar: (B, latent)."""
    assert recon.shape == target.shape
    n_img = recon.size
    assert n_img % (_SUBLANES * _LANES) == 0, (
        "total image elements must pack into (8,128) tiles")
    m_rows = n_img // _LANES

    # The .view(-1, 256*256*3) in the reference is a pure reshape; any row-major flat
    # layout gives the identical mean. Full (., 128) width keeps every tile DMA one
    # contiguous HBM chunk and every load an unmasked full-vreg load.
    recon2d = recon.reshape(m_rows, _LANES)
    target2d = target.reshape(m_rows, _LANES)

    tile_m, n_tiles, num_splits = _pick_tiling(m_rows, tile_m)
    tiles_per_split = n_tiles // num_splits

    def img_index_map(c, j):
        return (c * tiles_per_split + j, 0)

    kernel = functools.partial(_bce_partial_kernel, tile_m=tile_m)

    in_bytes = n_img * (recon.dtype.itemsize + target.dtype.itemsize)
    cost = pl.CostEstimate(
        flops=9 * n_img,                       # cmp/mul/sub/add/neg + fold adds
        transcendentals=2 * n_img,             # two logs per element
        bytes_accessed=in_bytes + num_splits * _SUBLANES * _LANES * 4,
    )

    partials = pl.pallas_call(
        kernel,
        out_shape=jax.ShapeDtypeStruct((num_splits * _SUBLANES, _LANES), jnp.float32),
        grid_spec=pltpu.PrefetchScalarGridSpec(
            num_scalar_prefetch=0,
            grid=(num_splits, tiles_per_split),
            in_specs=[
                pl.BlockSpec((tile_m, _LANES), img_index_map),   # recon tile
                pl.BlockSpec((tile_m, _LANES), img_index_map),   # target tile
            ],
            out_specs=pl.BlockSpec((_SUBLANES, _LANES), lambda c, j: (c, 0)),
        ),
        compiler_params=pltpu.CompilerParams(
            dimension_semantics=("parallel", "arbitrary")),
        cost_estimate=cost,
    )(recon2d, target2d)

    bce = jnp.sum(partials) / jnp.float32(n_img)

    # KLD over the tiny (B, latent) arrays: plain XLA (constant cost, keeps the kernel's
    # inner loop minimal).
    mu_f = mu.astype(jnp.float32)
    logvar_f = logvar.astype(jnp.float32)
    kld = -0.5 * jnp.mean(1.0 + logvar_f - mu_f * mu_f - jnp.exp(logvar_f))
    return bce + kld


def _reference_loss(recon, target, mu, logvar):
    x = recon.reshape(-1).astype(jnp.float32)
    y = target.reshape(-1).astype(jnp.float32)
    bce = jnp.mean(-(y * jnp.maximum(jnp.log(x), -100.0)
                     + (1.0 - y) * jnp.maximum(jnp.log(1.0 - x), -100.0)))
    kld = -0.5 * jnp.mean(1.0 + logvar - mu ** 2 - jnp.exp(logvar))
    return bce + kld


if __name__ == "__main__":
    # Small shapes consistent with the forward pass (reference implies 256x256x3 images;
    # we use 32x32x3 — the flatten/view only reshapes, the mean is identical).
    B, C, H, W, LATENT = 2, 3, 32, 32, 32

    key = jax.random.PRNGKey(0)
    k1, k2, k3, k4 = jax.random.split(key, 4)
    recon = jax.nn.sigmoid(jax.random.normal(k1, (B, C, H, W), jnp.float32))  # in (0,1), as BCELoss requires
    target = jax.random.uniform(k2, (B, C, H, W), jnp.float32)                # in [0,1]
    mu = jax.random.normal(k3, (B, LATENT), jnp.float32)
    logvar = 0.1 * jax.random.normal(k4, (B, LATENT), jnp.float32)

    ref = jax.block_until_ready(_reference_loss(recon, target, mu, logvar))

    # Default tiling (single full-extent tile at this small size).
    loss = jax.block_until_ready(vae_loss(recon, target, mu, logvar))
    assert jnp.allclose(loss, ref, rtol=1e-5, atol=1e-5), (loss, ref)

    # Small explicit tile to exercise multi-tile accumulation + the 2-way core split
    # (m_rows=48 -> 6 tiles of 8 rows -> grid (2, 3)).
    loss_tiled = jax.block_until_ready(vae_loss(recon, target, mu, logvar, tile_m=8))
    assert jnp.allclose(loss_tiled, ref, rtol=1e-5, atol=1e-5), (loss_tiled, ref)

    print("KERNEL_OK")
</pallas_src>

<mosaic_0001>
module attributes {stable_mosaic.version = 11 : i64} {
  func.func @_bce_partial_kernel(%arg0: i32, %arg1: i32, %arg2: memref<48x128xf32, #tpu.memory_space<vmem>>, %arg3: memref<48x128xf32, #tpu.memory_space<vmem>>, %arg4: memref<8x128xf32, #tpu.memory_space<vmem>>) attributes {dimension_semantics = [#tpu.dimension_semantics<parallel>, #tpu.dimension_semantics<arbitrary>], iteration_bounds = array<i64: 1, 1>, scalar_prefetch = 0 : i64, scratch_operands = 0 : i64, tpu.core_type = #tpu.core_type<tc>, window_params = [{transform_indices = @transform_0, window_bounds = array<i64: 48, 128>}, {transform_indices = @transform_1, window_bounds = array<i64: 48, 128>}, {transform_indices = @transform_2, window_bounds = array<i64: 8, 128>}]} {
    %c0_i32 = arith.constant 0 : i32
    %0 = arith.cmpi eq, %arg1, %c0_i32 : i32
    %1 = arith.extui %0 : i1 to i32
    %c0_i32_0 = arith.constant 0 : i32
    %2 = arith.cmpi ne, %1, %c0_i32_0 : i32
    scf.if %2 {
      %cst_13 = arith.constant 0.000000e+00 : f32
      %25 = vector.broadcast %cst_13 : f32 to vector<8x128xf32>
      %c0_14 = arith.constant 0 : index
      %c0_15 = arith.constant 0 : index
      %26 = vector.load %arg4[%c0_14, %c0_15] : memref<8x128xf32, #tpu.memory_space<vmem>>, vector<8x128xf32>
      tpu.vector_store %arg4[%c0_14, %c0_15], %25 {strides = array<i32>} : memref<8x128xf32, #tpu.memory_space<vmem>>, vector<8x128xf32>,
    } else {
    }
    %c0 = arith.constant 0 : index
    %c0_1 = arith.constant 0 : index
    %3 = vector.load %arg2[%c0, %c0_1] : memref<48x128xf32, #tpu.memory_space<vmem>>, vector<48x128xf32>
    %c0_2 = arith.constant 0 : index
    %c0_3 = arith.constant 0 : index
    %4 = vector.load %arg3[%c0_2, %c0_3] : memref<48x128xf32, #tpu.memory_space<vmem>>, vector<48x128xf32>
    %5 = math.log %3 : vector<48x128xf32>
    %cst = arith.constant -1.000000e+02 : f32
    %6 = vector.broadcast %cst : f32 to vector<48x128xf32>
    %7 = arith.maximumf %5, %6 : vector<48x128xf32>
    %cst_4 = arith.constant 1.000000e+00 : f32
    %8 = vector.broadcast %cst_4 : f32 to vector<48x128xf32>
    %9 = arith.subf %8, %3 : vector<48x128xf32>
    %10 = math.log %9 : vector<48x128xf32>
    %cst_5 = arith.constant -1.000000e+02 : f32
    %11 = vector.broadcast %cst_5 : f32 to vector<48x128xf32>
    %12 = arith.maximumf %10, %11 : vector<48x128xf32>
    %13 = arith.mulf %4, %7 : vector<48x128xf32>
    %cst_6 = arith.constant 1.000000e+00 : f32
    %14 = vector.broadcast %cst_6 : f32 to vector<48x128xf32>
    %15 = arith.subf %14, %4 : vector<48x128xf32>
    %16 = arith.mulf %15, %12 : vector<48x128xf32>
    %17 = arith.addf %13, %16 : vector<48x128xf32>
    %cst_7 = arith.constant 0.000000e+00 : f32
    %18 = vector.broadcast %cst_7 : f32 to vector<48x128xf32>
    %19 = arith.subf %18, %17 : vector<48x128xf32>
    %c0_8 = arith.constant 0 : index
    %c0_9 = arith.constant 0 : index
    %20 = vector.load %arg4[%c0_8, %c0_9] : memref<8x128xf32, #tpu.memory_space<vmem>>, vector<8x128xf32>
    %21 = vector.shape_cast %19 : vector<48x128xf32> to vector<6x8x128xf32>
    %cst_10 = arith.constant dense<0.000000e+00> : vector<8x128xf32>
    %22 = vector.multi_reduction <add>, %21, %cst_10 [0] : vector<6x8x128xf32> to vector<8x128xf32>
    %23 = arith.addf %20, %22 : vector<8x128xf32>
    %c0_11 = arith.constant 0 : index
    %c0_12 = arith.constant 0 : index
    %24 = vector.load %arg4[%c0_11, %c0_12] : memref<8x128xf32, #tpu.memory_space<vmem>>, vector<8x128xf32>
    tpu.vector_store %arg4[%c0_11, %c0_12], %23 {strides = array<i32>} : memref<8x128xf32, #tpu.memory_space<vmem>>, vector<8x128xf32>,
    return
  }
  func.func @transform_0(%arg0: i32, %arg1: i32) -> (i32, i32) {
    %c1_i32 = arith.constant 1 : i32
    %0 = arith.muli %arg0, %c1_i32 : i32
    %1 = arith.addi %0, %arg1 : i32
    %c0_i32 = arith.constant 0 : i32
    %c0_i32_0 = arith.constant 0 : i32
    return %1, %c0_i32 : i32, i32
  }
  func.func @transform_1(%arg0: i32, %arg1: i32) -> (i32, i32) {
    %c1_i32 = arith.constant 1 : i32
    %0 = arith.muli %arg0, %c1_i32 : i32
    %1 = arith.addi %0, %arg1 : i32
    %c0_i32 = arith.constant 0 : i32
    %c0_i32_0 = arith.constant 0 : i32
    return %1, %c0_i32 : i32, i32
  }
  func.func @transform_2(%arg0: i32, %arg1: i32) -> (i32, i32) {
    %c0_i32 = arith.constant 0 : i32
    %c0_i32_0 = arith.constant 0 : i32
    return %arg0, %c0_i32 : i32, i32
  }
}

</mosaic_0001>

<llo_original>
// kernel: tpu_custom_call.1
$region0: #{tpu_custom_call.1}
  #allocation0 [shape = 'u32[]', space=smem, size = 0x4, offset = 0x4, fixed_abs, tag = 'smem constant byte address 0x4 - core index']
  #allocation1 [shape = 'u32[144,128]{1,0:T(1,128)}', space=vmem, size = 0x12000, scoped, tag = 'internal scratch']
  %s0 = inlined_call_operand.hbm [shape: f32[48,128], index: 0, kind: input, shape index: {}]
  %s1 = inlined_call_operand.hbm [shape: f32[48,128], index: 1, kind: input, shape index: {}]
  %s2 = inlined_call_operand.hbm [shape: f32[8,128], index: 2, kind: output, shape index: {}]
  %s3 = sld [smem:[#allocation0]]
  $region30: #{tpu_custom_call.1} parent=0
    _
  %s5 = ssub.s32 1, %s3
  %s6 = scalar_select 0, %s5, %s3
  $region1: #{tpu_custom_call.1} parent=0
    #allocation2 [shape = 'u8[24576]{0}', space=vmem, size = 0x6000, scoped, tag = 'input window, operand 0, single buffered']
    #allocation3 [shape = 's32[1]{0}', space=sflag, size = 0x4, scoped, tag = 'scoped memory for tpu_custom_call.1']
    #allocation4 [shape = 's32[1]{0}', space=sflag, size = 0x4, scoped, tag = 'scoped memory for tpu_custom_call.1']
    #allocation5 [shape = 'u8[24576]{0}', space=vmem, size = 0x6000, scoped, tag = 'input window, operand 1, single buffered']
    #allocation6 [shape = 's32[1]{0}', space=sflag, size = 0x4, scoped, tag = 'scoped memory for tpu_custom_call.1']
    #allocation7 [shape = 'u8[4096]{0}', space=vmem, size = 0x1000, scoped, tag = 'output window, operand 0, single buffered']
    %7 = vsyncpa [#allocation3], 0
    %8 = vsyncpa [#allocation6], 0
    %9 = vsyncpa [#allocation4], 0
    // Predicated region
    $region2: #{tpu_custom_call.1} parent=1 // pred_check
      _
    $region3: #{tpu_custom_call.1} parent=1 // pred_check_branch
      %11 = sbr.rel (0) target = $region5
    $region4: #{tpu_custom_call.1} parent=1 // pred_region
      %s12 = sadd.s32 0, 0
      %s13 = smul.u32 6, %s12
      %s15 = ssub.s32 768, 768
      %16 = vsyncadd [#allocation3], %s15
      %s17 = smul.addr %s13, 128
      %s18 = scalar_lea.hbm %s0, %s17
      %s19 = sshll.u32 [#allocation2], 4
      %s20 = int_to_ptr.vmem [resolvable:$true] %s19
      %25 = dma.hbm_to_vmem [thread:$0]  %s18, 768, %s20, [#allocation3], 128, 128, 8
    $region5: #{tpu_custom_call.1} parent=1 // pred_fallthru
      _
    // Predicated region
    $region6: #{tpu_custom_call.1} parent=1 // pred_check
      _
    $region7: #{tpu_custom_call.1} parent=1 // pred_check_branch
      %27 = sbr.rel (0) target = $region9
    $region8: #{tpu_custom_call.1} parent=1 // pred_region
      %s28 = sadd.s32 0, 0
      %s29 = smul.u32 6, %s28
      %s31 = ssub.s32 768, 768
      %32 = vsyncadd [#allocation6], %s31
      %s33 = smul.addr %s29, 128
      %s34 = scalar_lea.hbm %s1, %s33
      %s35 = sshll.u32 [#allocation5], 4
      %s36 = int_to_ptr.vmem [resolvable:$true] %s35
      %41 = dma.hbm_to_vmem [thread:$0]  %s34, 768, %s36, [#allocation6], 128, 128, 8
    $region9: #{tpu_custom_call.1} parent=1 // pred_fallthru
      _
    // Predicated region
    $region10: #{tpu_custom_call.1} parent=1 // pred_check
      _
    $region11: #{tpu_custom_call.1} parent=1 // pred_check_branch
      %43 = sbr.rel (0) target = $region13
    $region12: #{tpu_custom_call.1} parent=1 // pred_region
      %44 = dma.done [#allocation3], 768
    $region13: #{tpu_custom_call.1} parent=1 // pred_fallthru
      _
    // Predicated region
    $region14: #{tpu_custom_call.1} parent=1 // pred_check
      _
    $region15: #{tpu_custom_call.1} parent=1 // pred_check_branch
      %46 = sbr.rel (0) target = $region17
    $region16: #{tpu_custom_call.1} parent=1 // pred_region
      %47 = dma.done [#allocation6], 768
    $region17: #{tpu_custom_call.1} parent=1 // pred_fallthru
      _
    %s48 = sadd.s32 0, 0
    %s49 = smul.u32 6, %s48
    %s50 = sadd.s32 0, 0
    %s51 = smul.u32 6, %s50
    %p52 = scmp.eq.s32.totalorder 0, 0
    // Predicated region
    $region18: #{tpu_custom_call.1} parent=1 // pred_check
      %p53 = pneg %p52
    $region19: #{tpu_custom_call.1} parent=1 // pred_check_branch
      %55 = sbr.rel (%p53) target = $region21
    $region20: #{tpu_custom_call.1} parent=1 // pred_region
      %56 = vst [vmem:[#allocation7] sm:$0xff] 0.0
    $region21: #{tpu_custom_call.1} parent=1 // pred_fallthru
      _
    %v57 = vld [vmem:[#allocation2] sm:$0xff]
    %v58 = vld [vmem:[#allocation2 + $0x8] sm:$0xff]
    %v59 = vld [vmem:[#allocation2 + $0x10] sm:$0xff]
    %v60 = vld [vmem:[#allocation2 + $0x18] sm:$0xff]
    %v61 = vld [vmem:[#allocation2 + $0x20] sm:$0xff]
    %v62 = vld [vmem:[#allocation2 + $0x28] sm:$0xff]
    %v63 = vld [vmem:[#allocation5] sm:$0xff]
    %v64 = vld [vmem:[#allocation5 + $0x8] sm:$0xff]
    %v65 = vld [vmem:[#allocation5 + $0x10] sm:$0xff]
    %v66 = vld [vmem:[#allocation5 + $0x18] sm:$0xff]
    %v67 = vld [vmem:[#allocation5 + $0x20] sm:$0xff]
    %v68 = vld [vmem:[#allocation5 + $0x28] sm:$0xff]
    %v69 = vlog2.pop %v57
    %v70 = vmul.f32 %v69, 0.6931472
    %v71 = vlog2.pop %v58
    %v72 = vmul.f32 %v71, 0.6931472
    %v73 = vlog2.pop %v59
    %v74 = vmul.f32 %v73, 0.6931472
    %v75 = vlog2.pop %v60
    %v76 = vmul.f32 %v75, 0.6931472
    %v77 = vlog2.pop %v61
    %v78 = vmul.f32 %v77, 0.6931472
    %v79 = vlog2.pop %v62
    %v80 = vmul.f32 %v79, 0.6931472
    %v81 = vmax.f32 %v70, -100.0
    %v82 = vmax.f32 %v72, -100.0
    %v83 = vmax.f32 %v74, -100.0
    %v84 = vmax.f32 %v76, -100.0
    %v85 = vmax.f32 %v78, -100.0
    %v86 = vmax.f32 %v80, -100.0
    %v87 = vsub.f32 1.0, %v57
    %v88 = vsub.f32 1.0, %v58
    %v89 = vsub.f32 1.0, %v59
    %v90 = vsub.f32 1.0, %v60
    %v91 = vsub.f32 1.0, %v61
    %v92 = vsub.f32 1.0, %v62
    %v93 = vlog2.pop %v87
    %v94 = vmul.f32 %v93, 0.6931472
    %v95 = vlog2.pop %v88
    %v96 = vmul.f32 %v95, 0.6931472
    %v97 = vlog2.pop %v89
    %v98 = vmul.f32 %v97, 0.6931472
    %v99 = vlog2.pop %v90
    %v100 = vmul.f32 %v99, 0.6931472
    %v101 = vlog2.pop %v91
    %v102 = vmul.f32 %v101, 0.6931472
    %v103 = vlog2.pop %v92
    %v104 = vmul.f32 %v103, 0.6931472
    %v105 = vmax.f32 %v94, -100.0
    %v106 = vmax.f32 %v96, -100.0
    %v107 = vmax.f32 %v98, -100.0
    %v108 = vmax.f32 %v100, -100.0
    %v109 = vmax.f32 %v102, -100.0
    %v110 = vmax.f32 %v104, -100.0
    %v111 = vmul.f32 %v63, %v81
    %v112 = vmul.f32 %v64, %v82
    %v113 = vmul.f32 %v65, %v83
    %v114 = vmul.f32 %v66, %v84
    %v115 = vmul.f32 %v67, %v85
    %v116 = vmul.f32 %v68, %v86
    %v117 = vsub.f32 1.0, %v63
    %v118 = vsub.f32 1.0, %v64
    %v119 = vsub.f32 1.0, %v65
    %v120 = vsub.f32 1.0, %v66
    %v121 = vsub.f32 1.0, %v67
    %v122 = vsub.f32 1.0, %v68
    %v123 = vmul.f32 %v117, %v105
    %v124 = vmul.f32 %v118, %v106
    %v125 = vmul.f32 %v119, %v107
    %v126 = vmul.f32 %v120, %v108
    %v127 = vmul.f32 %v121, %v109
    %v128 = vmul.f32 %v122, %v110
    %v129 = vadd.f32 %v111, %v123
    %v130 = vadd.f32 %v112, %v124
    %v131 = vadd.f32 %v113, %v125
    %v132 = vadd.f32 %v114, %v126
    %v133 = vadd.f32 %v115, %v127
    %v134 = vadd.f32 %v116, %v128
    %v135 = vsub.f32 0.0, %v129
    %v136 = vsub.f32 0.0, %v130
    %v137 = vsub.f32 0.0, %v131
    %v138 = vsub.f32 0.0, %v132
    %v139 = vsub.f32 0.0, %v133
    %v140 = vsub.f32 0.0, %v134
    %v141 = vld [vmem:[#allocation7] sm:$0xff]
    %v142 = vadd.f32 %v135, %v136
    %v143 = vadd.f32 %v142, %v137
    %v144 = vadd.f32 %v143, %v138
    %v145 = vadd.f32 %v144, %v139
    %v146 = vadd.f32 %v145, %v140
    %v147 = vadd.f32 %v141, %v146
    %148 = vst [vmem:[#allocation7] sm:$0xff] %v147
    // Predicated region
    $region22: #{tpu_custom_call.1} parent=1 // pred_check
      _
    $region23: #{tpu_custom_call.1} parent=1 // pred_check_branch
      %150 = sbr.rel (0) target = $region25
    $region24: #{tpu_custom_call.1} parent=1 // pred_region
      %s152 = ssub.s32 128, 128
      %153 = vsyncadd [#allocation4], %s152
      %s155 = sshll.u32 [#allocation7], 4
      %s156 = int_to_ptr.vmem [resolvable:$true] %s155
      %158 = dma.vmem_to_hbm [thread:$0]  %s156, 128, %s2, [#allocation4]
    $region25: #{tpu_custom_call.1} parent=1 // pred_fallthru
      _
    // Predicated region
    $region26: #{tpu_custom_call.1} parent=1 // pred_check
      _
    $region27: #{tpu_custom_call.1} parent=1 // pred_check_branch
      %160 = sbr.rel (0) target = $region29
    $region28: #{tpu_custom_call.1} parent=1 // pred_region
      %161 = dma.done [#allocation4], 128
    $region29: #{tpu_custom_call.1} parent=1 // pred_fallthru
      _
    %162 = vsyncpa [#allocation3], 1
    %163 = vsyncpa [#allocation6], 1
    %164 = vsyncpa [#allocation4], 1

</llo_original>
